<compile_context>
chip_gen: v7x
topology: tpu7x:2x2x1
jax: 0.10.0
libtpu: 0.0.40
codegen_flags: <defaults>
</compile_context>

<pallas_src>
import math

import jax
import jax.numpy as jnp
from jax.experimental import pallas as pl
from jax.experimental.pallas import tpu as pltpu

_INV_SQRT2 = 1.0 / math.sqrt(2.0)


# ----------------------------------------------------------------------------
# GELU (exact, erf-based) — matches nn.GELU() default.
# ----------------------------------------------------------------------------
def _erf_poly(z):
    """Abramowitz & Stegun 7.1.26 erf approximation (max abs err ~1.5e-7)."""
    a1, a2, a3, a4, a5 = (0.254829592, -0.284496736, 1.421413741,
                          -1.453152027, 1.061405429)
    p = 0.3275911
    az = jnp.abs(z)
    # Divide goes to the EUP slot (free under the MXU/VALU shadow).
    t = pl.reciprocal(1.0 + p * az, approx=True)
    poly = ((((a5 * t + a4) * t + a3) * t + a2) * t + a1) * t
    e = 1.0 - poly * jnp.exp(-az * az)
    return jnp.where(z < 0.0, -e, e)


def _gelu_exact(x):
    # 0.5 * x * (1 + erf(x / sqrt(2)))
    return 0.5 * x * (1.0 + _erf_poly(x * _INV_SQRT2))


# ----------------------------------------------------------------------------
# Kernel: grid = (row tiles, hidden slabs).  Hidden activation never hits HBM.
# ----------------------------------------------------------------------------
def _mlp_kernel(x_ref, w1_ref, b1_ref, w2_ref, b2_ref, o_ref, acc_ref):
    kh = pl.program_id(1)

    @pl.when(kh == 0)
    def _init():
        acc_ref[...] = jnp.zeros_like(acc_ref)

    # c_fc slab: (tm, C) @ (C, th) on the MXU, bf16 operands, f32 accumulate.
    x = x_ref[...].astype(jnp.bfloat16)
    h = jnp.dot(x, w1_ref[...], preferred_element_type=jnp.float32)
    h = h + b1_ref[...]                       # (1, th) f32 bias broadcast
    h = _gelu_exact(h)                        # exact GELU in f32 (VPU + EUP)

    # Partial c_proj: (tm, th) @ (th, C) accumulated into f32 VMEM scratch.
    acc_ref[...] += jnp.dot(h.astype(jnp.bfloat16), w2_ref[...],
                            preferred_element_type=jnp.float32)

    @pl.when(kh == pl.num_programs(1) - 1)
    def _finalize():
        # dropout(p=0) is identity in eval mode.
        o_ref[...] = (acc_ref[...] + b2_ref[...]).astype(o_ref.dtype)


# ----------------------------------------------------------------------------
# Tile / VMEM sizing helpers.
# ----------------------------------------------------------------------------
def _vmem_budget_bytes():
    cap = None
    try:
        cap = getattr(pltpu.get_tpu_info(), "vmem_capacity_bytes", None)
    except Exception:
        cap = None
    if not cap:
        cap = 64 * 1024 * 1024            # conservative: v7x per-TC VMEM
    # Leave headroom for compiler-internal scratch / spills.
    return max(cap - 16 * 1024 * 1024, cap // 2)


def _vmem_estimate(tm, C, th, out_itemsize):
    f32, bf16 = 4, 2
    return (2 * tm * C * f32              # x tile (f32 in HBM), double-buffered
            + 2 * C * th * bf16           # w_fc^T slab
            + 2 * th * f32                # b_fc slab
            + 2 * th * C * bf16           # w_proj^T slab
            + 2 * C * f32                 # b_proj
            + 2 * tm * C * out_itemsize   # output tile
            + tm * C * f32                # f32 accumulator scratch
            + tm * th * f32)              # live hidden activation


def _pick_row_tile(m, *, pref_multiple=256, min_steps=8, max_tile=512):
    divs = [d for d in range(8, min(m, max_tile) + 1, 8) if m % d == 0]
    if not divs:
        return m
    for cond in (
        lambda d: d % pref_multiple == 0 and m // d >= min_steps,
        lambda d: m // d >= min_steps,
        lambda d: m // d >= 2,
    ):
        good = [d for d in divs if cond(d)]
        if good:
            return max(good)
    return max(divs)


def _pick_hidden_tile(H, C, tm, out_itemsize, budget):
    cands = sorted({d for d in range(128, H + 1, 128) if H % d == 0} | {H},
                   reverse=True)
    for th in cands:
        if _vmem_estimate(tm, C, th, out_itemsize) <= budget:
            return th
    return cands[-1]


def _pick_tiles(M, C, H, out_itemsize, budget):
    tm = _pick_row_tile(M)
    while True:
        th = _pick_hidden_tile(H, C, tm, out_itemsize, budget)
        if _vmem_estimate(tm, C, th, out_itemsize) <= budget or tm <= 8:
            return tm, th
        smaller = [d for d in range(8, tm, 8) if M % d == 0]
        if not smaller:
            return tm, th
        tm = max(smaller)


# ----------------------------------------------------------------------------
# Wrappers.
# ----------------------------------------------------------------------------
def prepare_mlp_params(w_fc, b_fc, w_proj, b_proj):
    """One-time layout/dtype prep (call at parameter-load time, not per forward).

    w_fc   : PyTorch nn.Linear layout (4C, C)
    w_proj : PyTorch nn.Linear layout (C, 4C)
    """
    H, C = w_fc.shape
    assert w_proj.shape == (C, H)
    w1 = jnp.transpose(w_fc).astype(jnp.bfloat16)     # (C, 4C)  x @ W layout
    w2 = jnp.transpose(w_proj).astype(jnp.bfloat16)   # (4C, C)
    b1 = b_fc.reshape(1, H).astype(jnp.float32)
    b2 = b_proj.reshape(1, C).astype(jnp.float32)
    return w1, b1, w2, b2


def mlp_forward(x, params):
    """Fused MLP forward.  x: (B, T, C);  params from prepare_mlp_params."""
    w1, b1, w2, b2 = params
    B, T, C = x.shape
    H = w1.shape[1]
    M = B * T
    x2 = x.reshape(M, C)
    out_itemsize = jnp.dtype(x.dtype).itemsize

    budget = _vmem_budget_bytes()
    tm, th = _pick_tiles(M, C, H, out_itemsize, budget)
    grid = (M // tm, H // th)

    cost = pl.CostEstimate(
        flops=4 * M * C * H,                                   # two matmuls
        transcendentals=2 * M * H,                             # exp + rcp per elem
        bytes_accessed=(M * C * 4 + C * H * 2 + H * C * 2
                        + H * 4 + C * 4 + M * C * out_itemsize),
    )

    out = pl.pallas_call(
        _mlp_kernel,
        out_shape=jax.ShapeDtypeStruct((M, C), x.dtype),
        grid_spec=pltpu.PrefetchScalarGridSpec(
            num_scalar_prefetch=0,
            grid=grid,
            in_specs=[
                pl.BlockSpec((tm, C), lambda i, k: (i, 0)),   # x rows (held over k)
                pl.BlockSpec((C, th), lambda i, k: (0, k)),   # w_fc^T hidden slab
                pl.BlockSpec((1, th), lambda i, k: (0, k)),   # b_fc slab
                pl.BlockSpec((th, C), lambda i, k: (k, 0)),   # w_proj^T hidden slab
                pl.BlockSpec((1, C), lambda i, k: (0, 0)),    # b_proj (resident)
            ],
            out_specs=pl.BlockSpec((tm, C), lambda i, k: (i, 0)),
            scratch_shapes=[pltpu.VMEM((tm, C), jnp.float32)],
        ),
        compiler_params=pltpu.CompilerParams(
            dimension_semantics=("parallel", "arbitrary"),
            vmem_limit_bytes=int(budget),
        ),
        cost_estimate=cost,
    )(x2, w1, b1, w2, b2)

    return out.reshape(B, T, C)


def mlp(x, w_fc, b_fc, w_proj, b_proj):
    """Convenience one-shot wrapper (PyTorch-layout weights)."""
    return mlp_forward(x, prepare_mlp_params(w_fc, b_fc, w_proj, b_proj))


# ----------------------------------------------------------------------------
# Demo / self-test.
# ----------------------------------------------------------------------------
if __name__ == "__main__":
    # config: n_embd=32 (hidden 4*32=128), bias=True, dropout=0.0 ; B=2, T=8
    B, T, C = 2, 8, 32
    H = 4 * C

    key = jax.random.PRNGKey(0)
    kx, k1, k2, k3, k4 = jax.random.split(key, 5)
    x = jax.random.normal(kx, (B, T, C), dtype=jnp.float32)
    w_fc = jax.random.normal(k1, (H, C), dtype=jnp.float32) * 0.2    # PyTorch layout
    b_fc = jax.random.normal(k2, (H,), dtype=jnp.float32) * 0.2
    w_proj = jax.random.normal(k3, (C, H), dtype=jnp.float32) * 0.2  # PyTorch layout
    b_proj = jax.random.normal(k4, (C,), dtype=jnp.float32) * 0.2

    params = prepare_mlp_params(w_fc, b_fc, w_proj, b_proj)          # one-time prep
    y = jax.block_until_ready(mlp_forward(x, params))
    assert y.shape == (B, T, C)

    # Reference 1: mirrors kernel numerics (bf16 MXU operands, f32 accumulate).
    w1, b1, w2, b2 = params
    x2 = x.reshape(-1, C)
    hr = jnp.dot(x2.astype(jnp.bfloat16), w1, preferred_element_type=jnp.float32) + b1
    hr = jax.nn.gelu(hr, approximate=False)
    y_bf16ref = (jnp.dot(hr.astype(jnp.bfloat16), w2,
                         preferred_element_type=jnp.float32) + b2).reshape(B, T, C)

    # Reference 2: plain f32 forward matching the PyTorch module (eval mode).
    hf = jnp.dot(x2, w_fc.T) + b_fc
    hf = jax.nn.gelu(hf, approximate=False)
    y_f32ref = (jnp.dot(hf, w_proj.T) + b_proj).reshape(B, T, C)

    assert jnp.allclose(y, y_bf16ref, atol=1e-2, rtol=1e-2), "mismatch vs bf16-matched ref"
    assert jnp.allclose(y, y_f32ref, atol=6e-2, rtol=6e-2), "mismatch vs f32 reference"
    print("KERNEL_OK")
</pallas_src>

<mosaic_0001>
module attributes {stable_mosaic.version = 11 : i64} {
  func.func @_mlp_kernel(%arg0: i32, %arg1: i32, %arg2: memref<8x32xf32, #tpu.memory_space<vmem>>, %arg3: memref<32x128xbf16, #tpu.memory_space<vmem>>, %arg4: memref<1x128xf32, #tpu.memory_space<vmem>>, %arg5: memref<128x32xbf16, #tpu.memory_space<vmem>>, %arg6: memref<1x32xf32, #tpu.memory_space<vmem>>, %arg7: memref<8x32xf32, #tpu.memory_space<vmem>>, %arg8: memref<8x32xf32, #tpu.memory_space<vmem>>) attributes {dimension_semantics = [#tpu.dimension_semantics<parallel>, #tpu.dimension_semantics<arbitrary>], iteration_bounds = array<i64: 2, 1>, scalar_prefetch = 0 : i64, scratch_operands = 1 : i64, tpu.core_type = #tpu.core_type<tc>, window_params = [{transform_indices = @transform_0, window_bounds = array<i64: 8, 32>}, {transform_indices = @transform_1, window_bounds = array<i64: 32, 128>}, {transform_indices = @transform_2, window_bounds = array<i64: 1, 128>}, {transform_indices = @transform_3, window_bounds = array<i64: 128, 32>}, {pipeline_mode = #tpu.pipeline_mode<synchronous>, transform_indices = @transform_4, window_bounds = array<i64: 1, 32>}, {transform_indices = @transform_5, window_bounds = array<i64: 8, 32>}]} {
    %c0_i32 = arith.constant 0 : i32
    %0 = arith.cmpi eq, %arg1, %c0_i32 : i32
    %1 = arith.extui %0 : i1 to i32
    %c0_i32_0 = arith.constant 0 : i32
    %2 = arith.cmpi ne, %1, %c0_i32_0 : i32
    scf.if %2 {
      %cst_29 = arith.constant 0.000000e+00 : f32
      %58 = vector.broadcast %cst_29 : f32 to vector<8x32xf32>
      %c0_30 = arith.constant 0 : index
      %c0_31 = arith.constant 0 : index
      %59 = vector.load %arg8[%c0_30, %c0_31] : memref<8x32xf32, #tpu.memory_space<vmem>>, vector<8x32xf32>
      tpu.vector_store %arg8[%c0_30, %c0_31], %58 {strides = array<i32>} : memref<8x32xf32, #tpu.memory_space<vmem>>, vector<8x32xf32>,
    } else {
    }
    %c0 = arith.constant 0 : index
    %c0_1 = arith.constant 0 : index
    %3 = vector.load %arg2[%c0, %c0_1] : memref<8x32xf32, #tpu.memory_space<vmem>>, vector<8x32xf32>
    %4 = arith.truncf %3 : vector<8x32xf32> to vector<8x32xbf16>
    %c0_2 = arith.constant 0 : index
    %c0_3 = arith.constant 0 : index
    %5 = vector.load %arg3[%c0_2, %c0_3] : memref<32x128xbf16, #tpu.memory_space<vmem>>, vector<32x128xbf16>
    %cst = arith.constant dense<0.000000e+00> : vector<8x128xf32>
    %6 = tpu.matmul %4, %5, %cst {dimension_numbers = #tpu.dot_dimension_numbers<[1], [0], [0], [1], [0, 0, 1, 1], [], []>} : vector<8x32xbf16>, vector<32x128xbf16>, vector<8x128xf32> -> vector<8x128xf32>
    %c0_4 = arith.constant 0 : index
    %c0_5 = arith.constant 0 : index
    %7 = vector.load %arg4[%c0_4, %c0_5] : memref<1x128xf32, #tpu.memory_space<vmem>>, vector<1x128xf32>
    %8 = vector.broadcast %7 : vector<1x128xf32> to vector<8x128xf32>
    %9 = arith.addf %6, %8 : vector<8x128xf32>
    %cst_6 = arith.constant 5.000000e-01 : f32
    %10 = vector.broadcast %cst_6 : f32 to vector<8x128xf32>
    %11 = arith.mulf %10, %9 : vector<8x128xf32>
    %cst_7 = arith.constant 0.707106769 : f32
    %12 = vector.broadcast %cst_7 : f32 to vector<8x128xf32>
    %13 = arith.mulf %9, %12 : vector<8x128xf32>
    %14 = math.absf %13 : vector<8x128xf32>
    %cst_8 = arith.constant 0.327591091 : f32
    %15 = vector.broadcast %cst_8 : f32 to vector<8x128xf32>
    %16 = arith.mulf %15, %14 : vector<8x128xf32>
    %cst_9 = arith.constant 1.000000e+00 : f32
    %17 = vector.broadcast %cst_9 : f32 to vector<8x128xf32>
    %18 = arith.addf %17, %16 : vector<8x128xf32>
    %19 = tpu.reciprocal %18 {approx = true} : vector<8x128xf32> -> vector<8x128xf32>
    %cst_10 = arith.constant 1.06140542 : f32
    %20 = vector.broadcast %cst_10 : f32 to vector<8x128xf32>
    %21 = arith.mulf %20, %19 : vector<8x128xf32>
    %cst_11 = arith.constant -1.45315206 : f32
    %22 = vector.broadcast %cst_11 : f32 to vector<8x128xf32>
    %23 = arith.addf %21, %22 : vector<8x128xf32>
    %24 = arith.mulf %23, %19 : vector<8x128xf32>
    %cst_12 = arith.constant 1.42141378 : f32
    %25 = vector.broadcast %cst_12 : f32 to vector<8x128xf32>
    %26 = arith.addf %24, %25 : vector<8x128xf32>
    %27 = arith.mulf %26, %19 : vector<8x128xf32>
    %cst_13 = arith.constant -0.284496725 : f32
    %28 = vector.broadcast %cst_13 : f32 to vector<8x128xf32>
    %29 = arith.addf %27, %28 : vector<8x128xf32>
    %30 = arith.mulf %29, %19 : vector<8x128xf32>
    %cst_14 = arith.constant 0.254829586 : f32
    %31 = vector.broadcast %cst_14 : f32 to vector<8x128xf32>
    %32 = arith.addf %30, %31 : vector<8x128xf32>
    %33 = arith.mulf %32, %19 : vector<8x128xf32>
    %cst_15 = arith.constant 0.000000e+00 : f32
    %34 = vector.broadcast %cst_15 : f32 to vector<8x128xf32>
    %35 = arith.subf %34, %14 : vector<8x128xf32>
    %36 = arith.mulf %35, %14 : vector<8x128xf32>
    %37 = math.exp %36 : vector<8x128xf32>
    %38 = arith.mulf %33, %37 : vector<8x128xf32>
    %cst_16 = arith.constant 1.000000e+00 : f32
    %39 = vector.broadcast %cst_16 : f32 to vector<8x128xf32>
    %40 = arith.subf %39, %38 : vector<8x128xf32>
    %cst_17 = arith.constant 0.000000e+00 : f32
    %41 = vector.broadcast %cst_17 : f32 to vector<8x128xf32>
    %42 = arith.cmpf olt, %13, %41 : vector<8x128xf32>
    %cst_18 = arith.constant 0.000000e+00 : f32
    %43 = vector.broadcast %cst_18 : f32 to vector<8x128xf32>
    %44 = arith.subf %43, %40 : vector<8x128xf32>
    %45 = arith.select %42, %44, %40 : vector<8x128xi1>, vector<8x128xf32>
    %cst_19 = arith.constant 1.000000e+00 : f32
    %46 = vector.broadcast %cst_19 : f32 to vector<8x128xf32>
    %47 = arith.addf %46, %45 : vector<8x128xf32>
    %48 = arith.mulf %11, %47 : vector<8x128xf32>
    %c0_20 = arith.constant 0 : index
    %c0_21 = arith.constant 0 : index
    %49 = vector.load %arg8[%c0_20, %c0_21] : memref<8x32xf32, #tpu.memory_space<vmem>>, vector<8x32xf32>
    %50 = arith.truncf %48 : vector<8x128xf32> to vector<8x128xbf16>
    %c0_22 = arith.constant 0 : index
    %c0_23 = arith.constant 0 : index
    %51 = vector.load %arg5[%c0_22, %c0_23] : memref<128x32xbf16, #tpu.memory_space<vmem>>, vector<128x32xbf16>
    %cst_24 = arith.constant dense<0.000000e+00> : vector<8x32xf32>
    %52 = tpu.matmul %50, %51, %cst_24 {dimension_numbers = #tpu.dot_dimension_numbers<[1], [0], [0], [1], [0, 0, 1, 1], [], []>} : vector<8x128xbf16>, vector<128x32xbf16>, vector<8x32xf32> -> vector<8x32xf32>
    %53 = arith.addf %49, %52 : vector<8x32xf32>
    %c0_25 = arith.constant 0 : index
    %c0_26 = arith.constant 0 : index
    %54 = vector.load %arg8[%c0_25, %c0_26] : memref<8x32xf32, #tpu.memory_space<vmem>>, vector<8x32xf32>
    tpu.vector_store %arg8[%c0_25, %c0_26], %53 {strides = array<i32>} : memref<8x32xf32, #tpu.memory_space<vmem>>, vector<8x32xf32>,
    %c0_i32_27 = arith.constant 0 : i32
    %55 = arith.cmpi eq, %arg1, %c0_i32_27 : i32
    %56 = arith.extui %55 : i1 to i32
    %c0_i32_28 = arith.constant 0 : i32
    %57 = arith.cmpi ne, %56, %c0_i32_28 : i32
    scf.if %57 {
      %c0_29 = arith.constant 0 : index
      %c0_30 = arith.constant 0 : index
      %58 = vector.load %arg8[%c0_29, %c0_30] : memref<8x32xf32, #tpu.memory_space<vmem>>, vector<8x32xf32>
      %c0_31 = arith.constant 0 : index
      %c0_32 = arith.constant 0 : index
      %59 = vector.load %arg6[%c0_31, %c0_32] : memref<1x32xf32, #tpu.memory_space<vmem>>, vector<1x32xf32>
      %60 = vector.broadcast %59 : vector<1x32xf32> to vector<8x32xf32>
      %61 = arith.addf %58, %60 : vector<8x32xf32>
      %c0_33 = arith.constant 0 : index
      %c0_34 = arith.constant 0 : index
      %62 = vector.load %arg7[%c0_33, %c0_34] : memref<8x32xf32, #tpu.memory_space<vmem>>, vector<8x32xf32>
      tpu.vector_store %arg7[%c0_33, %c0_34], %61 {strides = array<i32>} : memref<8x32xf32, #tpu.memory_space<vmem>>, vector<8x32xf32>,
    } else {
    }
    return
  }
  func.func @transform_0(%arg0: i32, %arg1: i32) -> (i32, i32) {
    %c0_i32 = arith.constant 0 : i32
    %c0_i32_0 = arith.constant 0 : i32
    return %arg0, %c0_i32 : i32, i32
  }
  func.func @transform_1(%arg0: i32, %arg1: i32) -> (i32, i32) {
    %c0_i32 = arith.constant 0 : i32
    %c0_i32_0 = arith.constant 0 : i32
    return %c0_i32, %arg1 : i32, i32
  }
  func.func @transform_2(%arg0: i32, %arg1: i32) -> (i32, i32) {
    %c0_i32 = arith.constant 0 : i32
    %c0_i32_0 = arith.constant 0 : i32
    return %c0_i32, %arg1 : i32, i32
  }
  func.func @transform_3(%arg0: i32, %arg1: i32) -> (i32, i32) {
    %c0_i32 = arith.constant 0 : i32
    %c0_i32_0 = arith.constant 0 : i32
    return %arg1, %c0_i32 : i32, i32
  }
  func.func @transform_4(%arg0: i32, %arg1: i32) -> (i32, i32) {
    %c0_i32 = arith.constant 0 : i32
    %c0_i32_0 = arith.constant 0 : i32
    %c0_i32_1 = arith.constant 0 : i32
    return %c0_i32, %c0_i32_0 : i32, i32
  }
  func.func @transform_5(%arg0: i32, %arg1: i32) -> (i32, i32) {
    %c0_i32 = arith.constant 0 : i32
    %c0_i32_0 = arith.constant 0 : i32
    return %arg0, %c0_i32 : i32, i32
  }
}

</mosaic_0001>

<llo_original>
// kernel: tpu_custom_call.1
$region0: #{tpu_custom_call.1}
  #allocation0 [shape = 'u32[]', space=smem, size = 0x4, offset = 0x4, fixed_abs, tag = 'smem constant byte address 0x4 - core index']
  #allocation1 [shape = 'u32[144,128]{1,0:T(1,128)}', space=vmem, size = 0x12000, scoped, tag = 'internal scratch']
  #allocation2 [shape = 'f32[8,32]{1,0:T(8,128)}', space=vmem, size = 0x1000, scoped, tag = 'scratch operand']
  %s0 = inlined_call_operand.vmem [shape: f32[16,32], index: 0, kind: input, shape index: {}]
  %s1 = inlined_call_operand.vmem [shape: bf16[32,128], index: 1, kind: input, shape index: {}]
  %s2 = inlined_call_operand.vmem [shape: f32[1,128], index: 2, kind: input, shape index: {}]
  %s3 = inlined_call_operand.vmem [shape: bf16[128,32], index: 3, kind: input, shape index: {}]
  %s4 = inlined_call_operand.vmem [shape: f32[1,32], index: 4, kind: input, shape index: {}]
  %s5 = inlined_call_operand.hbm [shape: f32[16,32], index: 5, kind: output, shape index: {}]
  %s6 = sld [smem:[#allocation0]]
  $region61: #{tpu_custom_call.1} parent=0
    _
  %s8 = ssub.s32 1, %s6
  %s9 = scalar_select 0, %s8, %s6
  $region1: #{tpu_custom_call.1} parent=0
    #allocation3 [shape = 'u8[8192]{0}', space=vmem, size = 0x2000, scoped, tag = 'output window, operand 0']
    #allocation4 [shape = 's32[2]{0}', space=sflag, size = 0x8, scoped, tag = 'scoped memory for tpu_custom_call.1']
    %10 = vsyncpa [#allocation4], 0
    %s11 = scalar_lea.sflag [#allocation4], 1
    %12 = vsyncpa %s11, 0
    loop: start=0, step=1, limit=4
    $region2: #{tpu_custom_call.1} parent=1 // loop_pre_header
      _
    $region3: #{tpu_custom_call.1} parent=1 // loop_header
      %s14 = sphi 0, %s18
      %p15 = scmp.ge.s32.totalorder %s14, 4
      %s21 = sphi 0, %s33
      %s22 = sphi 0, %s29
      %s23 = sphi 0, %s21
      %s24 = sphi 0, %s22
      %s25 = sphi 0, %s23
      %s26 = sphi 0, %s24
      %s36 = sphi 0, %s38
      %s39 = sphi 0, %s36
      %s40 = sphi 0, %s39
      %s56 = sphi 0, %s40
      %s62 = sphi 0, %s64
      %s65 = sphi 0, %s62
      %s66 = sphi 0, %s65
      %s82 = sphi 0, %s66
      %s88 = sphi 0, %s90
      %s91 = sphi 0, %s88
      %s92 = sphi 0, %s91
      %s108 = sphi 0, %s92
      %s114 = sphi 0, %s116
      %s117 = sphi 0, %s114
      %s118 = sphi 0, %s117
      %s134 = sphi 0, %s118
      %s138 = sphi 0, %s138
      %s140 = sphi 0, %s138
      %s141 = sphi 0, %s140
      %s155 = sphi 0, %s141
      %s161 = sphi 0, %s163
      %s164 = sphi 0, %s161
      %s165 = sphi 0, %s164
      %s181 = sphi 0, %s165
    $region4: #{tpu_custom_call.1} parent=1 // loop_header_branch
      %17 = sbr.rel (%p15) target = $region8
    $region5: #{tpu_custom_call.1} parent=1 // loop_body
      %s19 = ssub.s32 %s14, 1
      %s20 = ssub.s32 %s14, 2
      %s27 = sadd.s32 1, %s22
      %p28 = scmp.ge.s32.totalorder %s27, 1
      %s29 = scalar_select %p28, 0, %s27
      %s30 = sadd.s32 1, %s21
      %s31 = scalar_select %p28, %s30, %s21
      %p32 = scmp.ge.s32.totalorder %s31, 2
      %s33 = scalar_select %p32, 0, %s31
      %s34 = ssub.s32 %s21, %s33
      %p35 = scmp.eq.s32.totalorder %s34, 0
      %s37 = sadd.s32 %s36, 1
      %s38 = scalar_select %p35, %s36, %s37
      %p41 = pneg %p35
      %p42 = scmp.eq.s32.totalorder %s14, 1
      %p43 = por %p41, %p42
      %p44 = scmp.ne.s32.totalorder %s36, %s39
      %p45 = scmp.eq.s32.totalorder %s14, 0
      %p46 = por %p44, %p45
      %p47 = scmp.ne.s32.totalorder %s36, %s39
      %p48 = scmp.eq.s32.totalorder %s19, 1
      %p49 = por %p47, %p48
      %p50 = scmp.ne.s32.totalorder %s39, %s40
      %p51 = scmp.eq.s32.totalorder %s19, 0
      %p52 = por %p50, %p51
      %p53 = scmp.ne.s32.totalorder %s39, %s40
      %p54 = scmp.eq.s32.totalorder %s20, 1
      %p55 = por %p53, %p54
      %p57 = scmp.ne.s32.totalorder %s40, %s56
      %p58 = scmp.eq.s32.totalorder %s20, 0
      %p59 = por %p57, %p58
      %s60 = ssub.s32 %s22, %s29
      %p61 = scmp.eq.s32.totalorder %s60, 0
      %s63 = sadd.s32 %s62, 1
      %s64 = scalar_select %p61, %s62, %s63
      %p67 = pneg %p61
      %p68 = scmp.eq.s32.totalorder %s14, 1
      %p69 = por %p67, %p68
      %p70 = scmp.ne.s32.totalorder %s62, %s65
      %p71 = scmp.eq.s32.totalorder %s14, 0
      %p72 = por %p70, %p71
      %p73 = scmp.ne.s32.totalorder %s62, %s65
      %p74 = scmp.eq.s32.totalorder %s19, 1
      %p75 = por %p73, %p74
      %p76 = scmp.ne.s32.totalorder %s65, %s66
      %p77 = scmp.eq.s32.totalorder %s19, 0
      %p78 = por %p76, %p77
      %p79 = scmp.ne.s32.totalorder %s65, %s66
      %p80 = scmp.eq.s32.totalorder %s20, 1
      %p81 = por %p79, %p80
      %p83 = scmp.ne.s32.totalorder %s66, %s82
      %p84 = scmp.eq.s32.totalorder %s20, 0
      %p85 = por %p83, %p84
      %s86 = ssub.s32 %s22, %s29
      %p87 = scmp.eq.s32.totalorder %s86, 0
      %s89 = sadd.s32 %s88, 1
      %s90 = scalar_select %p87, %s88, %s89
      %p93 = pneg %p87
      %p94 = scmp.eq.s32.totalorder %s14, 1
      %p95 = por %p93, %p94
      %p96 = scmp.ne.s32.totalorder %s88, %s91
      %p97 = scmp.eq.s32.totalorder %s14, 0
      %p98 = por %p96, %p97
      %p99 = scmp.ne.s32.totalorder %s88, %s91
      %p100 = scmp.eq.s32.totalorder %s19, 1
      %p101 = por %p99, %p100
      %p102 = scmp.ne.s32.totalorder %s91, %s92
      %p103 = scmp.eq.s32.totalorder %s19, 0
      %p104 = por %p102, %p103
      %p105 = scmp.ne.s32.totalorder %s91, %s92
      %p106 = scmp.eq.s32.totalorder %s20, 1
      %p107 = por %p105, %p106
      %p109 = scmp.ne.s32.totalorder %s92, %s108
      %p110 = scmp.eq.s32.totalorder %s20, 0
      %p111 = por %p109, %p110
      %s112 = ssub.s32 %s22, %s29
      %p113 = scmp.eq.s32.totalorder %s112, 0
      %s115 = sadd.s32 %s114, 1
      %s116 = scalar_select %p113, %s114, %s115
      %p119 = pneg %p113
      %p120 = scmp.eq.s32.totalorder %s14, 1
      %p121 = por %p119, %p120
      %p122 = scmp.ne.s32.totalorder %s114, %s117
      %p123 = scmp.eq.s32.totalorder %s14, 0
      %p124 = por %p122, %p123
      %p125 = scmp.ne.s32.totalorder %s114, %s117
      %p126 = scmp.eq.s32.totalorder %s19, 1
      %p127 = por %p125, %p126
      %p128 = scmp.ne.s32.totalorder %s117, %s118
      %p129 = scmp.eq.s32.totalorder %s19, 0
      %p130 = por %p128, %p129
      %p131 = scmp.ne.s32.totalorder %s117, %s118
      %p132 = scmp.eq.s32.totalorder %s20, 1
      %p133 = por %p131, %p132
      %p135 = scmp.ne.s32.totalorder %s118, %s134
      %p136 = scmp.eq.s32.totalorder %s20, 0
      %p137 = por %p135, %p136
      %s139 = sadd.s32 %s138, 1
      %p142 = scmp.eq.s32.totalorder %s14, 1
      %p143 = scmp.ne.s32.totalorder %s138, %s140
      %p144 = scmp.eq.s32.totalorder %s14, 0
      %p145 = por %p143, %p144
      %p146 = scmp.ne.s32.totalorder %s138, %s140
      %p147 = scmp.eq.s32.totalorder %s19, 1
      %p148 = por %p146, %p147
      %p149 = scmp.ne.s32.totalorder %s140, %s141
      %p150 = scmp.eq.s32.totalorder %s19, 0
      %p151 = por %p149, %p150
      %p152 = scmp.ne.s32.totalorder %s140, %s141
      %p153 = scmp.eq.s32.totalorder %s20, 1
      %p154 = por %p152, %p153
      %p156 = scmp.ne.s32.totalorder %s141, %s155
      %p157 = scmp.eq.s32.totalorder %s20, 0
      %p158 = por %p156, %p157
      %s159 = ssub.s32 %s21, %s33
      %p160 = scmp.eq.s32.totalorder %s159, 0
      %s162 = sadd.s32 %s161, 1
      %s163 = scalar_select %p160, %s161, %s162
      %p166 = pneg %p160
      %p167 = scmp.eq.s32.totalorder %s14, 1
      %p168 = por %p166, %p167
      %p169 = scmp.ne.s32.totalorder %s161, %s164
      %p170 = scmp.eq.s32.totalorder %s14, 0
      %p171 = por %p169, %p170
      %p172 = scmp.ne.s32.totalorder %s161, %s164
      %p173 = scmp.eq.s32.totalorder %s19, 1
      %p174 = por %p172, %p173
      %p175 = scmp.ne.s32.totalorder %s164, %s165
      %p176 = scmp.eq.s32.totalorder %s19, 0
      %p177 = por %p175, %p176
      %p178 = scmp.ne.s32.totalorder %s164, %s165
      %p179 = scmp.eq.s32.totalorder %s20, 1
      %p180 = por %p178, %p179
      %p182 = scmp.ne.s32.totalorder %s165, %s181
      %p183 = scmp.eq.s32.totalorder %s20, 0
      %p184 = por %p182, %p183
      %p185 = scmp.le.s32.totalorder 1, %s14
      %p186 = scmp.lt.s32.totalorder %s14, 3
      %p187 = pnand %p185, %p186
      %p188 = pneg %p187
      // Predicated region
      $region9: #{tpu_custom_call.1} parent=5 // pred_check
        _
      $region10: #{tpu_custom_call.1} parent=5 // pred_check_branch
        %190 = sbr.rel (%p187) target = $region12
      $region11: #{tpu_custom_call.1} parent=5 // pred_region
        %s191 = ssub.s32 %s14, 1
        // Predicated region
        $region13: #{tpu_custom_call.1} parent=11 // pred_check
          %p192 = pneg %p78
        $region14: #{tpu_custom_call.1} parent=11 // pred_check_branch
          %194 = sbr.rel (%p192) target = $region16
        $region15: #{tpu_custom_call.1} parent=11 // pred_region
          %p195 = scmp.lt.s32.totalorder %s24, 0
          %s196 = scalar_select %p195, %s24, 0
          %s197 = smul.addr %s196, 4
          %s198 = scalar_lea.vmem %s1, %s197
        $region16: #{tpu_custom_call.1} parent=11 // pred_fallthru
          _
        // Predicated region
        $region17: #{tpu_custom_call.1} parent=11 // pred_check
          %p199 = pneg %p104
        $region18: #{tpu_custom_call.1} parent=11 // pred_check_branch
          %201 = sbr.rel (%p199) target = $region20
        $region19: #{tpu_custom_call.1} parent=11 // pred_region
          %p202 = scmp.lt.s32.totalorder %s24, 0
          %s203 = scalar_select %p202, %s24, 0
          %s204 = scalar_lea.vmem %s2, %s203
        $region20: #{tpu_custom_call.1} parent=11 // pred_fallthru
          _
        // Predicated region
        $region21: #{tpu_custom_call.1} parent=11 // pred_check
          %p205 = pneg %p130
        $region22: #{tpu_custom_call.1} parent=11 // pred_check_branch
          %207 = sbr.rel (%p205) target = $region24
        $region23: #{tpu_custom_call.1} parent=11 // pred_region
          %s208 = smul.u32 16, %s24
          %p209 = scmp.lt.s32.totalorder %s208, 15
          %s210 = scalar_select %p209, %s208, 15
          %s211 = smul.addr %s210, 4
          %s212 = scalar_lea.vmem %s3, %s211
          %s213 = smul.u32 16, %s24
        $region24: #{tpu_custom_call.1} parent=11 // pred_fallthru
          _
        // Predicated region
        $region25: #{tpu_custom_call.1} parent=11 // pred_check
          %p214 = pneg %p151
        $region26: #{tpu_custom_call.1} parent=11 // pred_check_branch
          %216 = sbr.rel (%p214) target = $region28
        $region27: #{tpu_custom_call.1} parent=11 // pred_region
          _
        $region28: #{tpu_custom_call.1} parent=11 // pred_fallthru
          _
      $region12: #{tpu_custom_call.1} parent=5 // pred_fallthru
        _
      %p217 = scmp.lt.s32.totalorder %s14, 2
      // Predicated region
      $region29: #{tpu_custom_call.1} parent=5 // pred_check
        %p218 = pneg %p217
      $region30: #{tpu_custom_call.1} parent=5 // pred_check_branch
        %220 = sbr.rel (%p218) target = $region32
      $region31: #{tpu_custom_call.1} parent=5 // pred_region
        // Predicated region
        $region33: #{tpu_custom_call.1} parent=31 // pred_check
          %p221 = pneg %p46
        $region34: #{tpu_custom_call.1} parent=31 // pred_check_branch
          %223 = sbr.rel (%p221) target = $region36
        $region35: #{tpu_custom_call.1} parent=31 // pred_region
          %p224 = scmp.lt.s32.totalorder %s21, 1
          %s225 = scalar_select %p224, %s21, 1
          %s226 = smul.addr %s225, 8
          %s227 = scalar_lea.vmem %s0, %s226
        $region36: #{tpu_custom_call.1} parent=31 // pred_fallthru
          _
      $region32: #{tpu_custom_call.1} parent=5 // pred_fallthru
        _
      %p228 = scmp.le.s32.totalorder 1, %s14
      %p229 = scmp.lt.s32.totalorder %s14, 3
      %p230 = pnand %p228, %p229
      %p231 = pneg %p230
      // Predicated region
      $region37: #{tpu_custom_call.1} parent=5 // pred_check
        _
      $region38: #{tpu_custom_call.1} parent=5 // pred_check_branch
        %233 = sbr.rel (%p230) target = $region40
      $region39: #{tpu_custom_call.1} parent=5 // pred_region
        %s234 = ssub.s32 %s14, 1
        %p235 = scmp.lt.s32.totalorder %s23, 1
        %s236 = scalar_select %p235, %s23, 1
        %s237 = smul.addr %s236, 8
        %s238 = scalar_lea.vmem %s0, %s237
        %p239 = pneg %p52
        %p240 = pneg %p49
        %p241 = scmp.lt.s32.totalorder %s24, 0
        %s242 = scalar_select %p241, %s24, 0
        %s243 = smul.addr %s242, 4
        %s244 = scalar_lea.vmem %s1, %s243
        %p245 = pneg %p78
        %p246 = pneg %p75
        %p247 = scmp.lt.s32.totalorder %s24, 0
        %s248 = scalar_select %p247, %s24, 0
        %s249 = scalar_lea.vmem %s2, %s248
        %p250 = pneg %p104
        %p251 = pneg %p101
        %s252 = smul.u32 16, %s24
        %p253 = scmp.lt.s32.totalorder %s252, 15
        %s254 = scalar_select %p253, %s252, 15
        %s255 = smul.addr %s254, 4
        %s256 = scalar_lea.vmem %s3, %s255
        %p257 = pneg %p130
        %p258 = pneg %p127
        %p259 = pneg %p151
        %p260 = pneg %p148
        %p261 = pneg %p177
        %p262 = pneg %p174
        %s263 = sand.u32 %s164, 1
        %s264 = scalar_lea.sflag [#allocation4], %s263
        %s265 = sand.u32 %s164, 1
        %s266 = smul.addr %s265, 8
        %s267 = scalar_lea.vmem [#allocation3], %s266
        %p268 = scmp.lt.s32.totalorder %s23, 1
        %s269 = scalar_select %p268, %s23, 1
        %s270 = smul.addr %s269, 8
        %s271 = scalar_lea.vmem %s0, %s270
        %p272 = scmp.lt.s32.totalorder %s24, 0
        %s273 = scalar_select %p272, %s24, 0
        %s274 = smul.addr %s273, 4
        %s275 = scalar_lea.vmem %s1, %s274
        %p276 = scmp.lt.s32.totalorder %s24, 0
        %s277 = scalar_select %p276, %s24, 0
        %s278 = scalar_lea.vmem %s2, %s277
        %s279 = smul.u32 16, %s24
        %p280 = scmp.lt.s32.totalorder %s279, 15
        %s281 = scalar_select %p280, %s279, 15
        %s282 = smul.addr %s281, 4
        %s283 = scalar_lea.vmem %s3, %s282
        %s284 = smul.u32 16, %s24
        %p286 = scmp.eq.s32.totalorder %s24, 0
        // Predicated region
        $region41: #{tpu_custom_call.1} parent=39 // pred_check
          %p287 = pneg %p286
        $region42: #{tpu_custom_call.1} parent=39 // pred_check_branch
          %289 = sbr.rel (%p287) target = $region44
        $region43: #{tpu_custom_call.1} parent=39 // pred_region
          %vm290 = vcmask 261120
          %291 = vst.msk [vmem:[#allocation2] sm:$0xff] %vm290, 0.0
        $region44: #{tpu_custom_call.1} parent=39 // pred_fallthru
          _
        %v292 = vld [vmem:[%s271] sm:$0xff]
        %v293 = vpack.c.bf16 %v292, %v292
        %v294 = vld [vmem:[%s275] sm:$0xf]
        %v295 = vld [vmem:[%s275 + $0x4] sm:$0xf]
        %v296 = vld [vmem:[%s275 + $0x8] sm:$0xf]
        %v297 = vld [vmem:[%s275 + $0xc] sm:$0xf]
        %v298 = vld [vmem:[%s278] sm:$0x1]
        %v300 = vlaneseq
        %v301 = vshrl.u32 %v300, 7
        %v302 = vsub.s32 0, %v301
        %v303 = vrot.slane %v298, %v302
        %v309 = vunpack.c.l.b16 %v294
        %v310 = vunpack.c.l.b16 %v295
        %v311 = vunpack.c.l.b16 %v296
        %v312 = vunpack.c.l.b16 %v297
        %v313 = vpack.c.b16 %v310, %v309
        %v314 = vpack.c.b16 %v312, %v311
        %vm317 = vcmask 261120
        %v319 = vsel %vm317, %v293, 0
        %321 = vmatprep.subr.bf16.mxu0 0
        %322 = vmatpush1.bf16.msra.mxu0 %v313
        %323 = vmatprep.subr.bf16.mxu0 0
        %324 = vmatpush1.bf16.msra.mxu0 %v314
        %325 = vmatprep.subr.bf16.mxu0 0
        %326 = vmatpush1.bf16.msra.mxu0 0
        %327 = vmatprep.subr.bf16.mxu0 0
        %328 = vmatpush1.bf16.msra.mxu0 0
        %329 = vmatprep.subr.bf16.mxu0 0
        %330 = vmatpush1.bf16.msra.mxu0 0
        %331 = vmatprep.subr.bf16.mxu0 0
        %332 = vmatpush1.bf16.msra.mxu0 0
        %333 = vmatprep.subr.bf16.mxu0 0
        %334 = vmatpush1.bf16.msra.mxu0 0
        %335 = vmatprep.subr.bf16.mxu0 0
        %336 = vmatpush1.bf16.msra.mxu0 0
        %337 = vmatprep.subr.bf16.mxu0 0
        %338 = vmatpush1.bf16.msra.mxu0 0
        %339 = vmatprep.subr.bf16.mxu0 0
        %340 = vmatpush1.bf16.msra.mxu0 0
        %341 = vmatprep.subr.bf16.mxu0 0
        %342 = vmatpush1.bf16.msra.mxu0 0
        %343 = vmatprep.subr.bf16.mxu0 0
        %344 = vmatpush1.bf16.msra.mxu0 0
        %345 = vmatprep.subr.bf16.mxu0 0
        %346 = vmatpush1.bf16.msra.mxu0 0
        %347 = vmatprep.subr.bf16.mxu0 0
        %348 = vmatpush1.bf16.msra.mxu0 0
        %349 = vmatprep.subr.bf16.mxu0 0
        %350 = vmatpush1.bf16.msra.mxu0 0
        %351 = vmatprep.subr.bf16.mxu0 0
        %352 = vmatpush1.bf16.msra.mxu0 0
        %353 = vmatprep.mubr.bf16.mxu0 0
        %354 = vmatmul.mubr.bf16.gmra.mrb[0].mxu0 %v319
        %v355 = vpop.f32.mrb[0].mxu0
        %v356 = vadd.f32 %v303, %v355
        %v357 = vpop.f32.mrb[0].mxu0
        %v358 = vpop.f32.mrb[0].mxu0
        %v359 = vpop.f32.mrb[0].mxu0
        %360 = vdwg.mxu0
        %v361 = vmul.f32 %v356, 0.5
        %v362 = vmul.f32 %v356, 0.70710677
        %v363 = vand.u32 2147483647, %v362
        %v364 = vmul.f32 %v363, 0.3275911
        %v365 = vadd.f32 %v364, 1.0
        %v366 = vrcp.pop %v365
        %v367 = vmul.f32 %v366, 1.0614054
        %v368 = vadd.f32 %v367, -1.4531521
        %v369 = vmul.f32 %v368, %v366
        %v370 = vadd.f32 %v369, 1.4214138
        %v371 = vmul.f32 %v370, %v366
        %v372 = vadd.f32 %v371, -0.28449672
        %v373 = vmul.f32 %v372, %v366
        %v374 = vadd.f32 %v373, 0.2548296
        %v375 = vmul.f32 %v374, %v366
        %v376 = vsub.f32 0.0, %v363
        %v377 = vmul.f32 %v376, %v363
        %v378 = vmul.f32 %v377, 1.442695
        %v379 = vpow.pop %v378
        %v380 = vmul.f32 %v375, %v379
        %v381 = vsub.f32 1.0, %v380
        %vm382 = vcmp.lt.f32.partialorder %v362, 0.0
        %v383 = vsub.f32 0.0, %v381
        %v384 = vsel %vm382, %v383, %v381
        %v385 = vadd.f32 %v384, 1.0
        %v386 = vmul.f32 %v361, %v385
        %v387 = vld [vmem:[#allocation2] sm:$0xff]
        %v388 = vpack.c.bf16 %v386, %v386
        %v389 = vld [vmem:[%s283] sm:$0xf]
        %v390 = vld [vmem:[%s283 + $0x4] sm:$0xf]
        %v391 = vld [vmem:[%s283 + $0x8] sm:$0xf]
        %v392 = vld [vmem:[%s283 + $0xc] sm:$0xf]
        %v393 = vld [vmem:[%s283 + $0x10] sm:$0xf]
        %v394 = vld [vmem:[%s283 + $0x14] sm:$0xf]
        %v395 = vld [vmem:[%s283 + $0x18] sm:$0xf]
        %v396 = vld [vmem:[%s283 + $0x1c] sm:$0xf]
        %v397 = vld [vmem:[%s283 + $0x20] sm:$0xf]
        %v398 = vld [vmem:[%s283 + $0x24] sm:$0xf]
        %v399 = vld [vmem:[%s283 + $0x28] sm:$0xf]
        %v400 = vld [vmem:[%s283 + $0x2c] sm:$0xf]
        %v401 = vld [vmem:[%s283 + $0x30] sm:$0xf]
        %v402 = vld [vmem:[%s283 + $0x34] sm:$0xf]
        %v403 = vld [vmem:[%s283 + $0x38] sm:$0xf]
        %v404 = vld [vmem:[%s283 + $0x3c] sm:$0xf]
        %v421 = vunpack.c.l.b16 %v389
        %v422 = vunpack.c.l.b16 %v390
        %v423 = vunpack.c.l.b16 %v391
        %v424 = vunpack.c.l.b16 %v392
        %v425 = vunpack.c.l.b16 %v393
        %v426 = vunpack.c.l.b16 %v394
        %v427 = vunpack.c.l.b16 %v395
        %v428 = vunpack.c.l.b16 %v396
        %v429 = vunpack.c.l.b16 %v397
        %v430 = vunpack.c.l.b16 %v398
        %v431 = vunpack.c.l.b16 %v399
        %v432 = vunpack.c.l.b16 %v400
        %v433 = vunpack.c.l.b16 %v401
        %v434 = vunpack.c.l.b16 %v402
        %v435 = vunpack.c.l.b16 %v403
        %v436 = vunpack.c.l.b16 %v404
        %v437 = vpack.c.b16 %v422, %v421
        %v438 = vpack.c.b16 %v424, %v423
        %v439 = vpack.c.b16 %v426, %v425
        %v440 = vpack.c.b16 %v428, %v427
        %v441 = vpack.c.b16 %v430, %v429
        %v442 = vpack.c.b16 %v432, %v431
        %v443 = vpack.c.b16 %v434, %v433
        %v444 = vpack.c.b16 %v436, %v435
        %453 = vmatprep.subr.bf16.mxu0 0
        %454 = vmatpush1.bf16.msra.mxu0 %v437
        %455 = vmatprep.subr.bf16.mxu0 0
        %456 = vmatpush1.bf16.msra.mxu0 %v438
        %457 = vmatprep.subr.bf16.mxu0 0
        %458 = vmatpush1.bf16.msra.mxu0 %v439
        %459 = vmatprep.subr.bf16.mxu0 0
        %460 = vmatpush1.bf16.msra.mxu0 %v440
        %461 = vmatprep.subr.bf16.mxu0 0
        %462 = vmatpush1.bf16.msra.mxu0 %v441
        %463 = vmatprep.subr.bf16.mxu0 0
        %464 = vmatpush1.bf16.msra.mxu0 %v442
        %465 = vmatprep.subr.bf16.mxu0 0
        %466 = vmatpush1.bf16.msra.mxu0 %v443
        %467 = vmatprep.subr.bf16.mxu0 0
        %468 = vmatpush1.bf16.msra.mxu0 %v444
        %469 = vmatprep.subr.bf16.mxu0 0
        %470 = vmatpush1.bf16.msra.mxu0 0
        %471 = vmatprep.subr.bf16.mxu0 0
        %472 = vmatpush1.bf16.msra.mxu0 0
        %473 = vmatprep.subr.bf16.mxu0 0
        %474 = vmatpush1.bf16.msra.mxu0 0
        %475 = vmatprep.subr.bf16.mxu0 0
        %476 = vmatpush1.bf16.msra.mxu0 0
        %477 = vmatprep.subr.bf16.mxu0 0
        %478 = vmatpush1.bf16.msra.mxu0 0
        %479 = vmatprep.subr.bf16.mxu0 0
        %480 = vmatpush1.bf16.msra.mxu0 0
        %481 = vmatprep.subr.bf16.mxu0 0
        %482 = vmatpush1.bf16.msra.mxu0 0
        %483 = vmatprep.subr.bf16.mxu0 0
        %484 = vmatpush1.bf16.msra.mxu0 0
        %485 = vmatprep.mubr.bf16.mxu0 0
        %486 = vmatmul.mubr.bf16.gmra.mrb[0].mxu0 %v388
        %v487 = vpop.f32.mrb[0].mxu0
        %v488 = vadd.f32 0.0, %v487
        %v489 = vpop.f32.mrb[0].mxu0
        %v490 = vpop.f32.mrb[0].mxu0
        %v491 = vpop.f32.mrb[0].mxu0
        %492 = vdwg.mxu0
        %v493 = vadd.f32 %v387, %v488
        %494 = vst.msk [vmem:[#allocation2] sm:$0xff] %vm317, %v493
        // Predicated region
        $region45: #{tpu_custom_call.1} parent=39 // pred_check
          %p495 = pneg %p286
        $region46: #{tpu_custom_call.1} parent=39 // pred_check_branch
          %497 = sbr.rel (%p495) target = $region48
        $region47: #{tpu_custom_call.1} parent=39 // pred_region
          %v498 = vld [vmem:[#allocation2] sm:$0xff]
          %v499 = vld [vmem:[%s4] sm:$0x1]
          %v501 = vlaneseq
          %v502 = vshrl.u32 %v501, 7
          %v503 = vsub.s32 0, %v502
          %v504 = vrot.slane %v499, %v503
          %v506 = vadd.f32 %v498, %v504
          %507 = vst.msk [vmem:[%s267] sm:$0xff] %vm317, %v506
        $region48: #{tpu_custom_call.1} parent=39 // pred_fallthru
          _
        %s508 = sand.u32 %s164, 1
        %s509 = scalar_lea.sflag [#allocation4], %s508
        %s510 = sand.u32 %s164, 1
        %s511 = smul.addr %s510, 8
        %s512 = scalar_lea.vmem [#allocation3], %s511
        // Predicated region
        $region49: #{tpu_custom_call.1} parent=39 // pred_check
          %p513 = pneg %p174
        $region50: #{tpu_custom_call.1} parent=39 // pred_check_branch
          %515 = sbr.rel (%p513) target = $region52
        $region51: #{tpu_custom_call.1} parent=39 // pred_region
          %s517 = ssub.s32 128, 128
          %518 = vsyncadd %s509, %s517
          %s519 = smul.addr %s23, 128
          %s520 = scalar_lea.hbm %s5, %s519
          %s522 = sshll.u32 %s512, 4
          %s523 = int_to_ptr.vmem [resolvable:$true] %s522
          %525 = dma.vmem_to_hbm [thread:$0]  %s523, 128, %s520, %s509
        $region52: #{tpu_custom_call.1} parent=39 // pred_fallthru
          _
      $region40: #{tpu_custom_call.1} parent=5 // pred_fallthru
        _
      %p526 = scmp.le.s32.totalorder 2, %s14
      // Predicated region
      $region53: #{tpu_custom_call.1} parent=5 // pred_check
        %p527 = pneg %p526
      $region54: #{tpu_custom_call.1} parent=5 // pred_check_branch
        %529 = sbr.rel (%p527) target = $region56
      $region55: #{tpu_custom_call.1} parent=5 // pred_region
        %s530 = ssub.s32 %s14, 2
        // Predicated region
        $region57: #{tpu_custom_call.1} parent=55 // pred_check
          %p531 = pneg %p180
        $region58: #{tpu_custom_call.1} parent=55 // pred_check_branch
          %533 = sbr.rel (%p531) target = $region60
        $region59: #{tpu_custom_call.1} parent=55 // pred_region
          %s534 = sand.u32 %s165, 1
          %s535 = scalar_lea.sflag [#allocation4], %s534
          %s536 = sand.u32 %s165, 1
          %s537 = smul.addr %s536, 8
          %s538 = scalar_lea.vmem [#allocation3], %s537
          %539 = dma.done %s535, 128
        $region60: #{tpu_custom_call.1} parent=55 // pred_fallthru
          _
      $region56: #{tpu_custom_call.1} parent=5 // pred_fallthru
        _
    $region6: #{tpu_custom_call.1} parent=1 // loop_footer
      %s18 = sadd.s32 1, %s14
    $region7: #{tpu_custom_call.1} parent=1 // loop_footer_branch
      %13 = sbr.rel target = $region3
    $region8: #{tpu_custom_call.1} parent=1 // loop_exit
      _
    %540 = vsyncpa [#allocation4], 1
    %s541 = scalar_lea.sflag [#allocation4], 1
    %542 = vsyncpa %s541, 1

</llo_original>
